<compile_context>
chip_gen: v6e
topology: v6e:2x2x1
jax: 0.10.0
libtpu: 0.0.40
codegen_flags: <defaults>
</compile_context>

<pallas_src>
import functools

import jax
import jax.numpy as jnp
import numpy as np
from jax import lax
from jax.experimental import pallas as pl
from jax.experimental.pallas import tpu as pltpu


_VMEM_BUDGET_BYTES = 28 * 1024 * 1024   # per-step resident budget (inputs/outputs)
_VMEM_LIMIT_BYTES = 32 * 1024 * 1024    # explicit scoped limit (safe on v5e/v6e/v7x)
_WBIG_MAX_BYTES = 2 * 1024 * 1024       # gate for the block-diagonal pointwise weight


def _pick_batch_tile(n, rows, in_lanes, out_lanes, const_bytes,
                     budget_bytes=_VMEM_BUDGET_BYTES):
    """Largest divisor of n whose double-buffered input+output slabs (plus the
    grid-invariant operands) fit the VMEM budget, while keeping >= 2 grid steps
    whenever n >= 2 so both v7x TensorCores get work ("parallel" grid axis)."""
    per_batch = rows * (in_lanes + out_lanes) * 4 * 2        # f32, double-buffered
    avail = max(budget_bytes - 2 * const_bytes, per_batch)
    cap = n if n == 1 else max(1, n // 2)
    best = 1
    for cand in range(1, cap + 1):
        if n % cand == 0 and cand * per_batch <= avail:
            best = cand
    return best


# ----------------------------------------------------------------------------
# Path A: W folded into the lane axis (small W*Cin / W*Cout).
#   x slab (B_tile, H, W*Cin) -> out slab (B_tile, H, W*Cout); lane-dense store.
# ----------------------------------------------------------------------------
def _lane_fold_kernel(x_ref, wdw_ref, b1_ref, wbig_ref, b2_ref, o_ref, *,
                      h, w, cin, cout):
    b = x_ref.shape[0]
    wc, wco = w * cin, w * cout

    x = x_ref[...].astype(jnp.float32)                       # (B, H, W*Cin)
    wdw = wdw_ref[...].astype(jnp.float32)                   # (9, W*Cin), scale1 + dx-masks folded

    # Row index for the dy (top/bottom) halo masks, built once.
    row = lax.broadcasted_iota(jnp.int32, (b, h, wc), 1)

    # Depthwise 3x3, stride 1, pad 1.  Outer-dy / inner-dx: 2 sublane rolls and
    # 2 row-mask selects total; the dx halo masks live in zeroed weight lanes,
    # so the inner loop is one lane roll + one MAC per tap.
    acc = jnp.zeros((b, h, wc), jnp.float32)
    for dy in range(3):
        v = x
        if dy != 1:
            v = pltpu.roll(v, shift=(1 - dy) % h, axis=1)     # XLU sublane roll
            rmask = (row >= 1) if dy == 0 else (row < h - 1)
            v = jnp.where(rmask, v, 0.0)
        for dx in range(3):
            u = v
            if dx != 1:
                u = pltpu.roll(u, shift=((1 - dx) * cin) % wc, axis=2)  # lane roll
            acc = acc + u * wdw[dy * 3 + dx][None, None, :]

    # BN1 bias (scale already folded into wdw) + ReLU.
    acc = jnp.maximum(acc + b1_ref[0][None, None, :], 0.0)

    # Pointwise 1x1 conv as ONE MXU matmul (M=B*H, K=W*Cin, N=W*Cout), bf16
    # operands + f32 accumulate; the block-diagonal weight keeps the result in
    # the lane-dense output layout (no relayout before the store).
    y = jnp.dot(acc.reshape(b * h, wc).astype(wbig_ref.dtype), wbig_ref[...],
                preferred_element_type=jnp.float32)

    # BN2 bias + ReLU, lane-dense store.
    y = jnp.maximum(y + b2_ref[0][None, :], 0.0)
    o_ref[...] = y.reshape(b, h, wco).astype(o_ref.dtype)


def _conv_dw_lane_fold(x_nhwc, wdw9, bias1, wpw_s, bias2):
    n, h, w, cin = x_nhwc.shape
    cout = wpw_s.shape[1]
    wc, wco = w * cin, w * cout

    x_flat = x_nhwc.reshape(n, h, wc)                          # contiguous -> free

    # Tile per-channel taps/biases across W so every lane carries its own
    # coefficient, and fold the dx halo masks into zeroed weight lanes
    # (lane-indexed, hence exactly equivalent to masking in-kernel).
    wdw9_t = jnp.tile(wdw9, (1, w))                            # (9, W*Cin)
    lane = jnp.arange(wc)
    wdw9_t = wdw9_t.at[0::3].multiply((lane >= cin).astype(wdw9_t.dtype)[None, :])
    wdw9_t = wdw9_t.at[2::3].multiply((lane < wc - cin).astype(wdw9_t.dtype)[None, :])
    # TODO(synk): if inputs may contain Inf/NaN, wrapped lanes give 0*Inf=NaN;
    #             keep explicit lane masks in the kernel in that case.

    b1 = jnp.tile(bias1, w).reshape(1, wc)
    b2 = jnp.tile(bias2, w).reshape(1, wco)

    # Block-diagonal pointwise weight (bf16 MXU operand, scale2 folded in):
    #   wbig[x*Cin+ci, x'*Cout+co] = wpw_s[ci, co] if x == x' else 0
    wbig = jnp.einsum('io,xy->xiyo', wpw_s, jnp.eye(w, dtype=wpw_s.dtype))
    wbig = wbig.reshape(wc, wco).astype(jnp.bfloat16)

    const_bytes = wbig.size * 2 + wdw9_t.size * 4 + (b1.size + b2.size) * 4
    bt = _pick_batch_tile(n, h, wc, wco, const_bytes)

    kernel = functools.partial(_lane_fold_kernel, h=h, w=w, cin=cin, cout=cout)
    out_flat = pl.pallas_call(
        kernel,
        out_shape=jax.ShapeDtypeStruct((n, h, wco), jnp.float32),
        grid=(n // bt,),
        in_specs=[
            pl.BlockSpec((bt, h, wc), lambda i: (i, 0, 0)),
            pl.BlockSpec((9, wc), lambda i: (0, 0)),
            pl.BlockSpec((1, wc), lambda i: (0, 0)),
            pl.BlockSpec((wc, wco), lambda i: (0, 0)),
            pl.BlockSpec((1, wco), lambda i: (0, 0)),
        ],
        out_specs=pl.BlockSpec((bt, h, wco), lambda i: (i, 0, 0)),
        compiler_params=pltpu.CompilerParams(
            dimension_semantics=("parallel",),
            vmem_limit_bytes=_VMEM_LIMIT_BYTES),
    )(x_flat, wdw9_t, b1, wbig, b2)

    return out_flat.reshape(n, h, w, cout)                     # contiguous -> free


# ----------------------------------------------------------------------------
# Path B: channels-on-lanes fallback (real MobileNet channel counts), used when
# the block-diagonal weight would not fit VMEM.  Plain (B*H*W, Cin) x (Cin, Cout)
# matmul; halo handled with sublane rolls over the flattened H*W axis.
# ----------------------------------------------------------------------------
def _channels_last_kernel(x_ref, xidx_ref, wdw_ref, b1_ref, wpw_ref, b2_ref,
                          o_ref, *, h, w, cin, cout):
    b = x_ref.shape[0]
    hw = h * w

    x = x_ref[...].astype(jnp.float32)                        # (B, H*W, Cin)
    wdw = wdw_ref[...].astype(jnp.float32)                    # (9, Cin), scale1 folded
    xcol = xidx_ref[...][None, :, :]                          # (1, H*W, Cin) x-coordinate

    pos = lax.broadcasted_iota(jnp.int32, (b, hw, cin), 1)    # flattened position

    acc = jnp.zeros((b, hw, cin), jnp.float32)
    for dy in range(3):
        v = x
        if dy != 1:
            v = pltpu.roll(v, shift=((1 - dy) * w) % hw, axis=1)
            rmask = (pos >= w) if dy == 0 else (pos < (h - 1) * w)
            v = jnp.where(rmask, v, 0.0)
        for dx in range(3):
            u = v
            if dx != 1:
                u = pltpu.roll(u, shift=(1 - dx) % hw, axis=1)
                cmask = (xcol >= 1) if dx == 0 else (xcol < w - 1)
                u = jnp.where(cmask, u, 0.0)
            acc = acc + u * wdw[dy * 3 + dx][None, None, :]

    acc = jnp.maximum(acc + b1_ref[0][None, None, :], 0.0)

    y = jnp.dot(acc.reshape(b * hw, cin).astype(wpw_ref.dtype), wpw_ref[...],
                preferred_element_type=jnp.float32)
    y = jnp.maximum(y + b2_ref[0][None, :], 0.0)
    o_ref[...] = y.reshape(b, hw, cout).astype(o_ref.dtype)


def _conv_dw_channels_last(x_nhwc, wdw9, bias1, wpw_s, bias2):
    n, h, w, cin = x_nhwc.shape
    cout = wpw_s.shape[1]
    hw = h * w

    x_flat = x_nhwc.reshape(n, hw, cin)
    # Precomputed x-coordinate per flattened position (avoids in-kernel int div).
    xidx = jnp.broadcast_to(jnp.arange(w, dtype=jnp.int32)[None, :, None],
                            (h, w, cin)).reshape(hw, cin)
    b1 = bias1.reshape(1, cin)
    b2 = bias2.reshape(1, cout)
    wpw_bf16 = wpw_s.astype(jnp.bfloat16)

    const_bytes = (wdw9.size + b1.size + b2.size) * 4 + wpw_bf16.size * 2 + xidx.size * 4
    bt = _pick_batch_tile(n, hw, cin, cout, const_bytes)

    kernel = functools.partial(_channels_last_kernel, h=h, w=w, cin=cin, cout=cout)
    out_flat = pl.pallas_call(
        kernel,
        out_shape=jax.ShapeDtypeStruct((n, hw, cout), jnp.float32),
        grid=(n // bt,),
        in_specs=[
            pl.BlockSpec((bt, hw, cin), lambda i: (i, 0, 0)),
            pl.BlockSpec((hw, cin), lambda i: (0, 0)),
            pl.BlockSpec((9, cin), lambda i: (0, 0)),
            pl.BlockSpec((1, cin), lambda i: (0, 0)),
            pl.BlockSpec((cin, cout), lambda i: (0, 0)),
            pl.BlockSpec((1, cout), lambda i: (0, 0)),
        ],
        out_specs=pl.BlockSpec((bt, hw, cout), lambda i: (i, 0, 0)),
        compiler_params=pltpu.CompilerParams(
            dimension_semantics=("parallel",),
            vmem_limit_bytes=_VMEM_LIMIT_BYTES),
    )(x_flat, xidx, wdw9, b1, wpw_bf16, b2)

    return out_flat.reshape(n, h, w, cout)


# ----------------------------------------------------------------------------
# Public wrapper
# ----------------------------------------------------------------------------
def conv_dw_pallas(x_nhwc, wdw_33c, scale1, bias1, wpw, scale2, bias2, *,
                   stride=1, layout=None):
    """Fused depthwise-separable block (eval-mode BN folded to scale/bias).

    x_nhwc : (N, H, W, Cin) float32
    wdw_33c: (3, 3, Cin)    depthwise 3x3 weights
    scale1/bias1: (Cin,)    folded BN1
    wpw    : (Cin, Cout)    pointwise 1x1 weights
    scale2/bias2: (Cout,)   folded BN2
    returns (N, H, W, Cout) float32
    """
    assert stride == 1  # TODO(synk): strided depthwise output not implemented.
    n, h, w, cin = x_nhwc.shape
    cout = wpw.shape[1]
    wc, wco = w * cin, w * cout

    # Fold the BN scales into the conv weights; only the bias adds stay in-kernel.
    wdw9 = wdw_33c.reshape(9, cin) * scale1[None, :]           # (9, Cin)
    wpw_s = wpw * scale2[None, :]                              # (Cin, Cout)

    if layout is None:
        # The block-diagonal pointwise weight is only 1/W dense and grows as
        # W^2*Cin*Cout; use it only when it comfortably fits VMEM, otherwise
        # route to the channels-on-lanes layout (no redundant MXU FLOPs).
        layout = "lane_fold" if wc * wco * 2 <= _WBIG_MAX_BYTES else "channels_last"

    if layout == "lane_fold":
        return _conv_dw_lane_fold(x_nhwc, wdw9, bias1, wpw_s, bias2)
    return _conv_dw_channels_last(x_nhwc, wdw9, bias1, wpw_s, bias2)


def conv_dw_reference(x_nchw, wdw_oihw, wpw_oihw, bn1, bn2, *, stride=1, eps=1e-5):
    """Pure-JAX reference matching PyTorch (eval-mode BN) semantics, NCHW."""
    inp = x_nchw.shape[1]
    y = lax.conv_general_dilated(
        x_nchw, wdw_oihw, (stride, stride), ((1, 1), (1, 1)),
        dimension_numbers=("NCHW", "OIHW", "NCHW"), feature_group_count=inp)
    g, b, m, v = bn1
    y = (y - m[None, :, None, None]) / jnp.sqrt(v[None, :, None, None] + eps)
    y = y * g[None, :, None, None] + b[None, :, None, None]
    y = jnp.maximum(y, 0.0)
    y = lax.conv_general_dilated(
        y, wpw_oihw, (1, 1), ((0, 0), (0, 0)),
        dimension_numbers=("NCHW", "OIHW", "NCHW"))
    g, b, m, v = bn2
    y = (y - m[None, :, None, None]) / jnp.sqrt(v[None, :, None, None] + eps)
    y = y * g[None, :, None, None] + b[None, :, None, None]
    y = jnp.maximum(y, 0.0)
    return y


if __name__ == "__main__":
    # Shapes consistent with conv_dw(inp=4, oup=8, stride=1) on (2, 4, 16, 16).
    N, CIN, COUT, H, W = 2, 4, 8, 16, 16
    EPS = 1e-5

    key = jax.random.PRNGKey(0)
    kx, kdw, kpw, kg1, kb1, km1, kv1, kg2, kb2, km2, kv2 = jax.random.split(key, 11)

    x_nchw = jax.random.normal(kx, (N, CIN, H, W), jnp.float32)

    wdw_oihw = jax.random.normal(kdw, (CIN, 1, 3, 3), jnp.float32) * 0.3     # conv1
    wpw_oihw = jax.random.normal(kpw, (COUT, CIN, 1, 1), jnp.float32) * 0.3  # conv2
    bn1 = (jax.random.normal(kg1, (CIN,)) * 0.1 + 1.0,
           jax.random.normal(kb1, (CIN,)) * 0.1,
           jax.random.normal(km1, (CIN,)) * 0.1,
           jax.random.uniform(kv1, (CIN,), minval=0.5, maxval=1.5))
    bn2 = (jax.random.normal(kg2, (COUT,)) * 0.1 + 1.0,
           jax.random.normal(kb2, (COUT,)) * 0.1,
           jax.random.normal(km2, (COUT,)) * 0.1,
           jax.random.uniform(kv2, (COUT,), minval=0.5, maxval=1.5))

    def fold(bn):
        g, b, m, v = bn
        s = g / jnp.sqrt(v + EPS)
        return s, b - m * s

    scale1, bias1 = fold(bn1)
    scale2, bias2 = fold(bn2)

    x_nhwc = jnp.transpose(x_nchw, (0, 2, 3, 1))                  # (N, H, W, Cin)
    wdw_33c = jnp.transpose(wdw_oihw[:, 0, :, :], (1, 2, 0))      # (3, 3, Cin)
    wpw_cico = jnp.transpose(wpw_oihw[:, :, 0, 0], (1, 0))        # (Cin, Cout)

    ref = conv_dw_reference(x_nchw, wdw_oihw, wpw_oihw, bn1, bn2, stride=1, eps=EPS)
    ref = jax.block_until_ready(ref)

    # Tolerance relaxed vs. pure-f32 because the pointwise matmul operands are bf16.
    TOL = dict(rtol=3e-2, atol=3e-2)

    # Main path (block-diagonal / lane-fold layout, auto-selected for this size).
    out_nhwc = jax.jit(functools.partial(conv_dw_pallas, stride=1))(
        x_nhwc, wdw_33c, scale1, bias1, wpw_cico, scale2, bias2)
    out_nhwc = jax.block_until_ready(out_nhwc)
    out_nchw = jnp.transpose(out_nhwc, (0, 3, 1, 2))
    np.testing.assert_allclose(np.asarray(out_nchw), np.asarray(ref), **TOL)

    # Also exercise the channels-on-lanes fallback used for large layers.
    out_cl = jax.jit(functools.partial(conv_dw_pallas, stride=1,
                                       layout="channels_last"))(
        x_nhwc, wdw_33c, scale1, bias1, wpw_cico, scale2, bias2)
    out_cl = jax.block_until_ready(out_cl)
    out_cl_nchw = jnp.transpose(out_cl, (0, 3, 1, 2))
    np.testing.assert_allclose(np.asarray(out_cl_nchw), np.asarray(ref), **TOL)

    print("KERNEL_OK")
</pallas_src>

<mosaic_0001>
module attributes {stable_mosaic.version = 11 : i64} {
  func.func @_lane_fold_kernel(%arg0: i32, %arg1: memref<1x16x64xf32, #tpu.memory_space<vmem>>, %arg2: memref<9x64xf32, #tpu.memory_space<vmem>>, %arg3: memref<1x64xf32, #tpu.memory_space<vmem>>, %arg4: memref<64x128xbf16, #tpu.memory_space<vmem>>, %arg5: memref<1x128xf32, #tpu.memory_space<vmem>>, %arg6: memref<1x16x128xf32, #tpu.memory_space<vmem>>) attributes {dimension_semantics = [#tpu.dimension_semantics<parallel>], iteration_bounds = array<i64: 2>, scalar_prefetch = 0 : i64, scratch_operands = 0 : i64, tpu.core_type = #tpu.core_type<tc>, window_params = [{transform_indices = @transform_0, window_bounds = array<i64: 1, 16, 64>}, {pipeline_mode = #tpu.pipeline_mode<synchronous>, transform_indices = @transform_1, window_bounds = array<i64: 9, 64>}, {pipeline_mode = #tpu.pipeline_mode<synchronous>, transform_indices = @transform_2, window_bounds = array<i64: 1, 64>}, {pipeline_mode = #tpu.pipeline_mode<synchronous>, transform_indices = @transform_3, window_bounds = array<i64: 64, 128>}, {pipeline_mode = #tpu.pipeline_mode<synchronous>, transform_indices = @transform_4, window_bounds = array<i64: 1, 128>}, {transform_indices = @transform_5, window_bounds = array<i64: 1, 16, 128>}]} {
    %c0 = arith.constant 0 : index
    %c0_0 = arith.constant 0 : index
    %c0_1 = arith.constant 0 : index
    %0 = vector.load %arg1[%c0, %c0_0, %c0_1] : memref<1x16x64xf32, #tpu.memory_space<vmem>>, vector<1x16x64xf32>
    %c0_2 = arith.constant 0 : index
    %c0_3 = arith.constant 0 : index
    %1 = vector.load %arg2[%c0_2, %c0_3] : memref<9x64xf32, #tpu.memory_space<vmem>>, vector<9x64xf32>
    %2 = tpu.iota {dimensions = array<i32: 1>} : vector<1x16x64xi32>
    %cst = arith.constant 0.000000e+00 : f32
    %3 = vector.broadcast %cst : f32 to vector<1x16x64xf32>
    %c1_i32 = arith.constant 1 : i32
    %4 = tpu.dynamic_rotate %0 by %c1_i32 dim 1 : vector<1x16x64xf32>, i32 -> vector<1x16x64xf32>
    %c1_i32_4 = arith.constant 1 : i32
    %5 = vector.broadcast %c1_i32_4 : i32 to vector<1x16x64xi32>
    %6 = arith.cmpi sge, %2, %5 : vector<1x16x64xi32>
    %cst_5 = arith.constant 0.000000e+00 : f32
    %7 = vector.broadcast %cst_5 : f32 to vector<1x16x64xf32>
    %8 = arith.select %6, %4, %7 : vector<1x16x64xi1>, vector<1x16x64xf32>
    %c4_i32 = arith.constant 4 : i32
    %9 = tpu.dynamic_rotate %8 by %c4_i32 dim 2 : vector<1x16x64xf32>, i32 -> vector<1x16x64xf32>
    %10 = vector.extract_strided_slice %1 {offsets = [0, 0], sizes = [1, 64], strides = [1, 1]} : vector<9x64xf32> to vector<1x64xf32>
    %11 = vector.shape_cast %10 : vector<1x64xf32> to vector<64xf32>
    %12 = vector.shape_cast %11 : vector<64xf32> to vector<1x1x64xf32>
    %13 = vector.broadcast %12 : vector<1x1x64xf32> to vector<1x16x64xf32>
    %14 = arith.mulf %9, %13 : vector<1x16x64xf32>
    %15 = arith.addf %3, %14 : vector<1x16x64xf32>
    %16 = vector.extract_strided_slice %1 {offsets = [1, 0], sizes = [1, 64], strides = [1, 1]} : vector<9x64xf32> to vector<1x64xf32>
    %17 = vector.shape_cast %16 : vector<1x64xf32> to vector<64xf32>
    %18 = vector.shape_cast %17 : vector<64xf32> to vector<1x1x64xf32>
    %19 = vector.broadcast %18 : vector<1x1x64xf32> to vector<1x16x64xf32>
    %20 = arith.mulf %8, %19 : vector<1x16x64xf32>
    %21 = arith.addf %15, %20 : vector<1x16x64xf32>
    %c60_i32 = arith.constant 60 : i32
    %22 = tpu.dynamic_rotate %8 by %c60_i32 dim 2 : vector<1x16x64xf32>, i32 -> vector<1x16x64xf32>
    %23 = vector.extract_strided_slice %1 {offsets = [2, 0], sizes = [1, 64], strides = [1, 1]} : vector<9x64xf32> to vector<1x64xf32>
    %24 = vector.shape_cast %23 : vector<1x64xf32> to vector<64xf32>
    %25 = vector.shape_cast %24 : vector<64xf32> to vector<1x1x64xf32>
    %26 = vector.broadcast %25 : vector<1x1x64xf32> to vector<1x16x64xf32>
    %27 = arith.mulf %22, %26 : vector<1x16x64xf32>
    %28 = arith.addf %21, %27 : vector<1x16x64xf32>
    %c4_i32_6 = arith.constant 4 : i32
    %29 = tpu.dynamic_rotate %0 by %c4_i32_6 dim 2 : vector<1x16x64xf32>, i32 -> vector<1x16x64xf32>
    %30 = vector.extract_strided_slice %1 {offsets = [3, 0], sizes = [1, 64], strides = [1, 1]} : vector<9x64xf32> to vector<1x64xf32>
    %31 = vector.shape_cast %30 : vector<1x64xf32> to vector<64xf32>
    %32 = vector.shape_cast %31 : vector<64xf32> to vector<1x1x64xf32>
    %33 = vector.broadcast %32 : vector<1x1x64xf32> to vector<1x16x64xf32>
    %34 = arith.mulf %29, %33 : vector<1x16x64xf32>
    %35 = arith.addf %28, %34 : vector<1x16x64xf32>
    %36 = vector.extract_strided_slice %1 {offsets = [4, 0], sizes = [1, 64], strides = [1, 1]} : vector<9x64xf32> to vector<1x64xf32>
    %37 = vector.shape_cast %36 : vector<1x64xf32> to vector<64xf32>
    %38 = vector.shape_cast %37 : vector<64xf32> to vector<1x1x64xf32>
    %39 = vector.broadcast %38 : vector<1x1x64xf32> to vector<1x16x64xf32>
    %40 = arith.mulf %0, %39 : vector<1x16x64xf32>
    %41 = arith.addf %35, %40 : vector<1x16x64xf32>
    %c60_i32_7 = arith.constant 60 : i32
    %42 = tpu.dynamic_rotate %0 by %c60_i32_7 dim 2 : vector<1x16x64xf32>, i32 -> vector<1x16x64xf32>
    %43 = vector.extract_strided_slice %1 {offsets = [5, 0], sizes = [1, 64], strides = [1, 1]} : vector<9x64xf32> to vector<1x64xf32>
    %44 = vector.shape_cast %43 : vector<1x64xf32> to vector<64xf32>
    %45 = vector.shape_cast %44 : vector<64xf32> to vector<1x1x64xf32>
    %46 = vector.broadcast %45 : vector<1x1x64xf32> to vector<1x16x64xf32>
    %47 = arith.mulf %42, %46 : vector<1x16x64xf32>
    %48 = arith.addf %41, %47 : vector<1x16x64xf32>
    %c15_i32 = arith.constant 15 : i32
    %49 = tpu.dynamic_rotate %0 by %c15_i32 dim 1 : vector<1x16x64xf32>, i32 -> vector<1x16x64xf32>
    %c15_i32_8 = arith.constant 15 : i32
    %50 = vector.broadcast %c15_i32_8 : i32 to vector<1x16x64xi32>
    %51 = arith.cmpi slt, %2, %50 : vector<1x16x64xi32>
    %cst_9 = arith.constant 0.000000e+00 : f32
    %52 = vector.broadcast %cst_9 : f32 to vector<1x16x64xf32>
    %53 = arith.select %51, %49, %52 : vector<1x16x64xi1>, vector<1x16x64xf32>
    %c4_i32_10 = arith.constant 4 : i32
    %54 = tpu.dynamic_rotate %53 by %c4_i32_10 dim 2 : vector<1x16x64xf32>, i32 -> vector<1x16x64xf32>
    %55 = vector.extract_strided_slice %1 {offsets = [6, 0], sizes = [1, 64], strides = [1, 1]} : vector<9x64xf32> to vector<1x64xf32>
    %56 = vector.shape_cast %55 : vector<1x64xf32> to vector<64xf32>
    %57 = vector.shape_cast %56 : vector<64xf32> to vector<1x1x64xf32>
    %58 = vector.broadcast %57 : vector<1x1x64xf32> to vector<1x16x64xf32>
    %59 = arith.mulf %54, %58 : vector<1x16x64xf32>
    %60 = arith.addf %48, %59 : vector<1x16x64xf32>
    %61 = vector.extract_strided_slice %1 {offsets = [7, 0], sizes = [1, 64], strides = [1, 1]} : vector<9x64xf32> to vector<1x64xf32>
    %62 = vector.shape_cast %61 : vector<1x64xf32> to vector<64xf32>
    %63 = vector.shape_cast %62 : vector<64xf32> to vector<1x1x64xf32>
    %64 = vector.broadcast %63 : vector<1x1x64xf32> to vector<1x16x64xf32>
    %65 = arith.mulf %53, %64 : vector<1x16x64xf32>
    %66 = arith.addf %60, %65 : vector<1x16x64xf32>
    %c60_i32_11 = arith.constant 60 : i32
    %67 = tpu.dynamic_rotate %53 by %c60_i32_11 dim 2 : vector<1x16x64xf32>, i32 -> vector<1x16x64xf32>
    %68 = vector.extract_strided_slice %1 {offsets = [8, 0], sizes = [1, 64], strides = [1, 1]} : vector<9x64xf32> to vector<1x64xf32>
    %69 = vector.shape_cast %68 : vector<1x64xf32> to vector<64xf32>
    %70 = vector.shape_cast %69 : vector<64xf32> to vector<1x1x64xf32>
    %71 = vector.broadcast %70 : vector<1x1x64xf32> to vector<1x16x64xf32>
    %72 = arith.mulf %67, %71 : vector<1x16x64xf32>
    %73 = arith.addf %66, %72 : vector<1x16x64xf32>
    %c0_12 = arith.constant 0 : index
    %c0_13 = arith.constant 0 : index
    %74 = vector.load %arg3[%c0_12, %c0_13] : memref<1x64xf32, #tpu.memory_space<vmem>>, vector<1x64xf32>
    %75 = vector.shape_cast %74 : vector<1x64xf32> to vector<64xf32>
    %76 = vector.shape_cast %75 : vector<64xf32> to vector<1x1x64xf32>
    %77 = vector.broadcast %76 : vector<1x1x64xf32> to vector<1x16x64xf32>
    %78 = arith.addf %73, %77 : vector<1x16x64xf32>
    %cst_14 = arith.constant 0.000000e+00 : f32
    %79 = vector.broadcast %cst_14 : f32 to vector<1x16x64xf32>
    %80 = arith.maximumf %78, %79 : vector<1x16x64xf32>
    %81 = vector.shape_cast %80 : vector<1x16x64xf32> to vector<16x64xf32>
    %82 = arith.truncf %81 : vector<16x64xf32> to vector<16x64xbf16>
    %c0_15 = arith.constant 0 : index
    %c0_16 = arith.constant 0 : index
    %83 = vector.load %arg4[%c0_15, %c0_16] : memref<64x128xbf16, #tpu.memory_space<vmem>>, vector<64x128xbf16>
    %cst_17 = arith.constant dense<0.000000e+00> : vector<16x128xf32>
    %84 = tpu.matmul %82, %83, %cst_17 {dimension_numbers = #tpu.dot_dimension_numbers<[1], [0], [0], [1], [0, 0, 1, 1], [], []>} : vector<16x64xbf16>, vector<64x128xbf16>, vector<16x128xf32> -> vector<16x128xf32>
    %c0_18 = arith.constant 0 : index
    %c0_19 = arith.constant 0 : index
    %85 = vector.load %arg5[%c0_18, %c0_19] : memref<1x128xf32, #tpu.memory_space<vmem>>, vector<1x128xf32>
    %86 = vector.shape_cast %85 : vector<1x128xf32> to vector<128xf32>
    %87 = vector.shape_cast %86 : vector<128xf32> to vector<1x128xf32>
    %88 = vector.broadcast %87 : vector<1x128xf32> to vector<16x128xf32>
    %89 = arith.addf %84, %88 : vector<16x128xf32>
    %cst_20 = arith.constant 0.000000e+00 : f32
    %90 = vector.broadcast %cst_20 : f32 to vector<16x128xf32>
    %91 = arith.maximumf %89, %90 : vector<16x128xf32>
    %92 = vector.shape_cast %91 : vector<16x128xf32> to vector<1x16x128xf32>
    %c0_21 = arith.constant 0 : index
    %c0_22 = arith.constant 0 : index
    %c0_23 = arith.constant 0 : index
    %93 = vector.load %arg6[%c0_21, %c0_22, %c0_23] : memref<1x16x128xf32, #tpu.memory_space<vmem>>, vector<1x16x128xf32>
    tpu.vector_store %arg6[%c0_21, %c0_22, %c0_23], %92 {strides = array<i32>} : memref<1x16x128xf32, #tpu.memory_space<vmem>>, vector<1x16x128xf32>,
    return
  }
  func.func @transform_0(%arg0: i32) -> (i32, i32, i32) {
    %c0_i32 = arith.constant 0 : i32
    %c0_i32_0 = arith.constant 0 : i32
    %c0_i32_1 = arith.constant 0 : i32
    return %arg0, %c0_i32, %c0_i32_0 : i32, i32, i32
  }
  func.func @transform_1(%arg0: i32) -> (i32, i32) {
    %c0_i32 = arith.constant 0 : i32
    %c0_i32_0 = arith.constant 0 : i32
    %c0_i32_1 = arith.constant 0 : i32
    return %c0_i32, %c0_i32_0 : i32, i32
  }
  func.func @transform_2(%arg0: i32) -> (i32, i32) {
    %c0_i32 = arith.constant 0 : i32
    %c0_i32_0 = arith.constant 0 : i32
    %c0_i32_1 = arith.constant 0 : i32
    return %c0_i32, %c0_i32_0 : i32, i32
  }
  func.func @transform_3(%arg0: i32) -> (i32, i32) {
    %c0_i32 = arith.constant 0 : i32
    %c0_i32_0 = arith.constant 0 : i32
    %c0_i32_1 = arith.constant 0 : i32
    return %c0_i32, %c0_i32_0 : i32, i32
  }
  func.func @transform_4(%arg0: i32) -> (i32, i32) {
    %c0_i32 = arith.constant 0 : i32
    %c0_i32_0 = arith.constant 0 : i32
    %c0_i32_1 = arith.constant 0 : i32
    return %c0_i32, %c0_i32_0 : i32, i32
  }
  func.func @transform_5(%arg0: i32) -> (i32, i32, i32) {
    %c0_i32 = arith.constant 0 : i32
    %c0_i32_0 = arith.constant 0 : i32
    %c0_i32_1 = arith.constant 0 : i32
    return %arg0, %c0_i32, %c0_i32_0 : i32, i32, i32
  }
}

</mosaic_0001>

<llo_original>
// kernel: tile.23
$region0: #{tile.23}
  #allocation0 [shape = 's32[1]{0}', space=sflag, size = 0x4, scoped, tag = 'scoped memory for tile.23']
  %s0 = inlined_call_operand.vmem [shape: f32[4], index: 0, kind: input, shape index: {}]
  %s1 = inlined_call_operand.vmem [shape: f32[16,4], index: 1, kind: output, shape index: {}]
  // Predicated region
  $region2: #{tile.23} parent=0 // pred_check
    _
  $region3: #{tile.23} parent=0 // pred_check_branch
    %3 = sbr.rel (0) target = $region5
  $region4: #{tile.23} parent=0 // pred_region
    _
  $region5: #{tile.23} parent=0 // pred_fallthru
    _
  %v4 = vld [vmem:[%s0] ss:$0 sm:$0xff]
  %5 = vst [vmem:[%s1] sm:$0xff] %v4
  %s6 = scalar_lea.vmem %s1, 8
  %7 = vst [vmem:[%s6] sm:$0xff] %v4

// kernel: tile.24
$region0: #{tile.24}
  %s0 = inlined_call_operand.vmem [shape: f32[16,4], index: 0, kind: input, shape index: {}]
  %s1 = inlined_call_operand.vmem [shape: f32[1,64], index: 1, kind: output, shape index: {}]
  $region1: #{tile.24} parent=0
    #allocation0 [shape = 'u8[4096]{0}', space=vmem, size = 0x1000, scoped, tag = 'scoped mem for output reshape']
    %v2 = vld [vmem:[%s0] sm:$0x1]
    %vm3 = vcmask 31744
    %4 = vst.msk [vmem:[#allocation0] sm:$0x1] %vm3, %v2
    %s5 = scalar_lea.vmem %s0, 15
    %v6 = vld [vmem:[%s5] sm:$0x1]
    %7 = vrot.lane.b32.xlu0 %v6, 60
    %v8 = vpop.permute.xlu0 %7
    %vm9 = vcmask 523744
    %10 = vst.msk [vmem:[#allocation0] sm:$0x1] %vm9, %v8
    %s11 = scalar_lea.vmem %s0, 14
    %v12 = vld [vmem:[%s11] sm:$0x1]
    %13 = vrot.lane.b32.xlu0 %v12, 56
    %v14 = vpop.permute.xlu0 %13
    %vm15 = vcmask 490944
    %16 = vst.msk [vmem:[#allocation0] sm:$0x1] %vm15, %v14
    %s17 = scalar_lea.vmem %s0, 13
    %v18 = vld [vmem:[%s17] sm:$0x1]
    %19 = vrot.lane.b32.xlu0 %v18, 52
    %v20 = vpop.permute.xlu0 %19
    %vm21 = vcmask 458144
    %22 = vst.msk [vmem:[#allocation0] sm:$0x1] %vm21, %v20
    %s23 = scalar_lea.vmem %s0, 12
    %v24 = vld [vmem:[%s23] sm:$0x1]
    %25 = vrot.lane.b32.xlu0 %v24, 48
    %v26 = vpop.permute.xlu0 %25
    %vm27 = vcmask 425344
    %28 = vst.msk [vmem:[#allocation0] sm:$0x1] %vm27, %v26
    %s29 = scalar_lea.vmem %s0, 11
    %v30 = vld [vmem:[%s29] sm:$0x1]
    %31 = vrot.lane.b32.xlu0 %v30, 44
    %v32 = vpop.permute.xlu0 %31
    %vm33 = vcmask 392544
    %34 = vst.msk [vmem:[#allocation0] sm:$0x1] %vm33, %v32
    %s35 = scalar_lea.vmem %s0, 10
    %v36 = vld [vmem:[%s35] sm:$0x1]
    %37 = vrot.lane.b32.xlu0 %v36, 40
    %v38 = vpop.permute.xlu0 %37
    %vm39 = vcmask 359744
    %40 = vst.msk [vmem:[#allocation0] sm:$0x1] %vm39, %v38
    %s41 = scalar_lea.vmem %s0, 9
    %v42 = vld [vmem:[%s41] sm:$0x1]
    %43 = vrot.lane.b32.xlu0 %v42, 36
    %v44 = vpop.permute.xlu0 %43
    %vm45 = vcmask 326944
    %46 = vst.msk [vmem:[#allocation0] sm:$0x1] %vm45, %v44
    %s47 = scalar_lea.vmem %s0, 8
    %v48 = vld [vmem:[%s47] sm:$0x1]
    %49 = vrot.lane.b32.xlu0 %v48, 32
    %v50 = vpop.permute.xlu0 %49
    %vm51 = vcmask 294144
    %52 = vst.msk [vmem:[#allocation0] sm:$0x1] %vm51, %v50
    %s53 = scalar_lea.vmem %s0, 7
    %v54 = vld [vmem:[%s53] sm:$0x1]
    %55 = vrot.lane.b32.xlu0 %v54, 28
    %v56 = vpop.permute.xlu0 %55
    %vm57 = vcmask 261344
    %58 = vst.msk [vmem:[#allocation0] sm:$0x1] %vm57, %v56
    %s59 = scalar_lea.vmem %s0, 6
    %v60 = vld [vmem:[%s59] sm:$0x1]
    %61 = vrot.lane.b32.xlu0 %v60, 24
    %v62 = vpop.permute.xlu0 %61
    %vm63 = vcmask 228544
    %64 = vst.msk [vmem:[#allocation0] sm:$0x1] %vm63, %v62
    %s65 = scalar_lea.vmem %s0, 5
    %v66 = vld [vmem:[%s65] sm:$0x1]
    %67 = vrot.lane.b32.xlu0 %v66, 20
    %v68 = vpop.permute.xlu0 %67
    %vm69 = vcmask 195744
    %70 = vst.msk [vmem:[#allocation0] sm:$0x1] %vm69, %v68
    %s71 = scalar_lea.vmem %s0, 4
    %v72 = vld [vmem:[%s71] sm:$0x1]
    %73 = vrot.lane.b32.xlu0 %v72, 16
    %v74 = vpop.permute.xlu0 %73
    %vm75 = vcmask 162944
    %76 = vst.msk [vmem:[#allocation0] sm:$0x1] %vm75, %v74
    %s77 = scalar_lea.vmem %s0, 3
    %v78 = vld [vmem:[%s77] sm:$0x1]
    %79 = vrot.lane.b32.xlu0 %v78, 12
    %v80 = vpop.permute.xlu0 %79
    %vm81 = vcmask 130144
    %82 = vst.msk [vmem:[#allocation0] sm:$0x1] %vm81, %v80
    %s83 = scalar_lea.vmem %s0, 2
    %v84 = vld [vmem:[%s83] sm:$0x1]
    %85 = vrot.lane.b32.xlu0 %v84, 8
    %v86 = vpop.permute.xlu0 %85
    %vm87 = vcmask 97344
    %88 = vst.msk [vmem:[#allocation0] sm:$0x1] %vm87, %v86
    %s89 = scalar_lea.vmem %s0, 1
    %v90 = vld [vmem:[%s89] sm:$0x1]
    %91 = vrot.lane.b32.xlu0 %v90, 4
    %v92 = vpop.permute.xlu0 %91
    %vm93 = vcmask 64544
    %94 = vst.msk [vmem:[#allocation0] sm:$0x1] %vm93, %v92
    %s96 = sshll.u32 1, 1
    %s97 = ssub.s32 %s96, 1
    %v99 = vld [vmem:[#allocation0] sm:%s97]
    %s100 = sshll.u32 1, 1
    %s101 = ssub.s32 %s100, 1
    %102 = vst [vmem:[%s1] sm:%s101] %v99

// kernel: tile.28
$region0: #{tile.28}
  #allocation0 [shape = 's32[1]{0}', space=sflag, size = 0x4, scoped, tag = 'scoped memory for tile.28']
  %s0 = inlined_call_operand.vmem [shape: f32[8], index: 0, kind: input, shape index: {}]
  %s1 = inlined_call_operand.vmem [shape: f32[16,8], index: 1, kind: output, shape index: {}]
  // Predicated region
  $region2: #{tile.28} parent=0 // pred_check
    _
  $region3: #{tile.28} parent=0 // pred_check_branch
    %3 = sbr.rel (0) target = $region5
  $region4: #{tile.28} parent=0 // pred_region
    _
  $region5: #{tile.28} parent=0 // pred_fallthru
    _
  %v4 = vld [vmem:[%s0] ss:$0 sm:$0xff]
  %5 = vst [vmem:[%s1] sm:$0xff] %v4
  %s6 = scalar_lea.vmem %s1, 8
  %7 = vst [vmem:[%s6] sm:$0xff] %v4

// kernel: tile.29
$region0: #{tile.29}
  %s0 = inlined_call_operand.vmem [shape: f32[16,8], index: 0, kind: input, shape index: {}]
  %s1 = inlined_call_operand.vmem [shape: f32[1,128], index: 1, kind: output, shape index: {}]
  $region1: #{tile.29} parent=0
    #allocation0 [shape = 'u8[4096]{0}', space=vmem, size = 0x1000, scoped, tag = 'scoped mem for output reshape']
    %v2 = vld [vmem:[%s0] sm:$0x1]
    %vm3 = vcmask 64512
    %4 = vst.msk [vmem:[#allocation0] sm:$0x1] %vm3, %v2
    %s5 = scalar_lea.vmem %s0, 15
    %v6 = vld [vmem:[%s5] sm:$0x1]
    %7 = vrot.lane.b32.xlu0 %v6, 120
    %v8 = vpop.permute.xlu0 %7
    %vm9 = vcmask 1048512
    %10 = vst.msk [vmem:[#allocation0] sm:$0x1] %vm9, %v8
    %s11 = scalar_lea.vmem %s0, 14
    %v12 = vld [vmem:[%s11] sm:$0x1]
    %13 = vrot.lane.b32.xlu0 %v12, 112
    %v14 = vpop.permute.xlu0 %13
    %vm15 = vcmask 982912
    %16 = vst.msk [vmem:[#allocation0] sm:$0x1] %vm15, %v14
    %s17 = scalar_lea.vmem %s0, 13
    %v18 = vld [vmem:[%s17] sm:$0x1]
    %19 = vrot.lane.b32.xlu0 %v18, 104
    %v20 = vpop.permute.xlu0 %19
    %vm21 = vcmask 917312
    %22 = vst.msk [vmem:[#allocation0] sm:$0x1] %vm21, %v20
    %s23 = scalar_lea.vmem %s0, 12
    %v24 = vld [vmem:[%s23] sm:$0x1]
    %25 = vrot.lane.b32.xlu0 %v24, 96
    %v26 = vpop.permute.xlu0 %25
    %vm27 = vcmask 851712
    %28 = vst.msk [vmem:[#allocation0] sm:$0x1] %vm27, %v26
    %s29 = scalar_lea.vmem %s0, 11
    %v30 = vld [vmem:[%s29] sm:$0x1]
    %31 = vrot.lane.b32.xlu0 %v30, 88
    %v32 = vpop.permute.xlu0 %31
    %vm33 = vcmask 786112
    %34 = vst.msk [vmem:[#allocation0] sm:$0x1] %vm33, %v32
    %s35 = scalar_lea.vmem %s0, 10
    %v36 = vld [vmem:[%s35] sm:$0x1]
    %37 = vrot.lane.b32.xlu0 %v36, 80
    %v38 = vpop.permute.xlu0 %37
    %vm39 = vcmask 720512
    %40 = vst.msk [vmem:[#allocation0] sm:$0x1] %vm39, %v38
    %s41 = scalar_lea.vmem %s0, 9
    %v42 = vld [vmem:[%s41] sm:$0x1]
    %43 = vrot.lane.b32.xlu0 %v42, 72
    %v44 = vpop.permute.xlu0 %43
    %vm45 = vcmask 654912
    %46 = vst.msk [vmem:[#allocation0] sm:$0x1] %vm45, %v44
    %s47 = scalar_lea.vmem %s0, 8
    %v48 = vld [vmem:[%s47] sm:$0x1]
    %49 = vrot.lane.b32.xlu0 %v48, 64
    %v50 = vpop.permute.xlu0 %49
    %vm51 = vcmask 589312
    %52 = vst.msk [vmem:[#allocation0] sm:$0x1] %vm51, %v50
    %s53 = scalar_lea.vmem %s0, 7
    %v54 = vld [vmem:[%s53] sm:$0x1]
    %55 = vrot.lane.b32.xlu0 %v54, 56
    %v56 = vpop.permute.xlu0 %55
    %vm57 = vcmask 523712
    %58 = vst.msk [vmem:[#allocation0] sm:$0x1] %vm57, %v56
    %s59 = scalar_lea.vmem %s0, 6
    %v60 = vld [vmem:[%s59] sm:$0x1]
    %61 = vrot.lane.b32.xlu0 %v60, 48
    %v62 = vpop.permute.xlu0 %61
    %vm63 = vcmask 458112
    %64 = vst.msk [vmem:[#allocation0] sm:$0x1] %vm63, %v62
    %s65 = scalar_lea.vmem %s0, 5
    %v66 = vld [vmem:[%s65] sm:$0x1]
    %67 = vrot.lane.b32.xlu0 %v66, 40
    %v68 = vpop.permute.xlu0 %67
    %vm69 = vcmask 392512
    %70 = vst.msk [vmem:[#allocation0] sm:$0x1] %vm69, %v68
    %s71 = scalar_lea.vmem %s0, 4
    %v72 = vld [vmem:[%s71] sm:$0x1]
    %73 = vrot.lane.b32.xlu0 %v72, 32
    %v74 = vpop.permute.xlu0 %73
    %vm75 = vcmask 326912
    %76 = vst.msk [vmem:[#allocation0] sm:$0x1] %vm75, %v74
    %s77 = scalar_lea.vmem %s0, 3
    %v78 = vld [vmem:[%s77] sm:$0x1]
    %79 = vrot.lane.b32.xlu0 %v78, 24
    %v80 = vpop.permute.xlu0 %79
    %vm81 = vcmask 261312
    %82 = vst.msk [vmem:[#allocation0] sm:$0x1] %vm81, %v80
    %s83 = scalar_lea.vmem %s0, 2
    %v84 = vld [vmem:[%s83] sm:$0x1]
    %85 = vrot.lane.b32.xlu0 %v84, 16
    %v86 = vpop.permute.xlu0 %85
    %vm87 = vcmask 195712
    %88 = vst.msk [vmem:[#allocation0] sm:$0x1] %vm87, %v86
    %s89 = scalar_lea.vmem %s0, 1
    %v90 = vld [vmem:[%s89] sm:$0x1]
    %91 = vrot.lane.b32.xlu0 %v90, 8
    %v92 = vpop.permute.xlu0 %91
    %vm93 = vcmask 130112
    %94 = vst.msk [vmem:[#allocation0] sm:$0x1] %vm93, %v92
    %s96 = sshll.u32 1, 1
    %s97 = ssub.s32 %s96, 1
    %v99 = vld [vmem:[#allocation0] sm:%s97]
    %s100 = sshll.u32 1, 1
    %s101 = ssub.s32 %s100, 1
    %102 = vst [vmem:[%s1] sm:%s101] %v99

// kernel: conv_dw_pallas.1
$region0: #{conv_dw_pallas.1}
  #allocation0 [shape = 'u32[]', space=smem, size = 0x4, offset = 0x4, fixed_abs, tag = 'smem constant byte address 0x4 - core index']
  #allocation1 [shape = 'u32[144,128]{1,0:T(1,128)}', space=vmem, size = 0x12000, scoped, tag = 'internal scratch']
  %s0 = inlined_call_operand.vmem [shape: f32[2,16,64], index: 0, kind: input, shape index: {}]
  %s1 = inlined_call_operand.vmem [shape: f32[9,64], index: 1, kind: input, shape index: {}]
  %s2 = inlined_call_operand.vmem [shape: f32[1,64], index: 2, kind: input, shape index: {}]
  %s3 = inlined_call_operand.vmem [shape: bf16[64,128], index: 3, kind: input, shape index: {}]
  %s4 = inlined_call_operand.vmem [shape: f32[1,128], index: 4, kind: input, shape index: {}]
  %s5 = inlined_call_operand.vmem [shape: f32[2,16,128], index: 5, kind: output, shape index: {}]
  %s6 = sld [smem:[#allocation0]]
  $region53: #{conv_dw_pallas.1} parent=0
    _
  %s8 = ssub.s32 1, %s6
  %s9 = scalar_select 0, %s8, %s6
  loop: start=0, step=1, limit=4
  $region2: #{conv_dw_pallas.1} parent=0 // loop_pre_header
    _
  $region3: #{conv_dw_pallas.1} parent=0 // loop_header
    %s11 = sphi 0, %s15
    %p12 = scmp.ge.s32.totalorder %s11, 4
    %s21 = sphi 0, %s23
    %s24 = sphi 0, %s21
    %s25 = sphi 0, %s24
    %s41 = sphi 0, %s25
    %s45 = sphi 0, %s45
    %s47 = sphi 0, %s45
    %s48 = sphi 0, %s47
    %s62 = sphi 0, %s48
    %s66 = sphi 0, %s66
    %s68 = sphi 0, %s66
    %s69 = sphi 0, %s68
    %s83 = sphi 0, %s69
    %s87 = sphi 0, %s87
    %s89 = sphi 0, %s87
    %s90 = sphi 0, %s89
    %s104 = sphi 0, %s90
    %s108 = sphi 0, %s108
    %s110 = sphi 0, %s108
    %s111 = sphi 0, %s110
    %s125 = sphi 0, %s111
    %s131 = sphi 0, %s133
    %s134 = sphi 0, %s131
    %s135 = sphi 0, %s134
    %s151 = sphi 0, %s135
  $region4: #{conv_dw_pallas.1} parent=0 // loop_header_branch
    %14 = sbr.rel (%p12) target = $region8
  $region5: #{conv_dw_pallas.1} parent=0 // loop_body
    %s16 = ssub.s32 %s11, 1
    %s17 = ssub.s32 %s11, 2
    %s18 = sadd.s32 %s11, 1
    %s19 = ssub.s32 %s11, %s18
    %p20 = scmp.eq.s32.totalorder %s19, 0
    %s22 = sadd.s32 %s21, 1
    %s23 = scalar_select %p20, %s21, %s22
    %p26 = pneg %p20
    %p27 = scmp.eq.s32.totalorder %s11, 1
    %p28 = por %p26, %p27
    %p29 = scmp.ne.s32.totalorder %s21, %s24
    %p30 = scmp.eq.s32.totalorder %s11, 0
    %p31 = por %p29, %p30
    %p32 = scmp.ne.s32.totalorder %s21, %s24
    %p33 = scmp.eq.s32.totalorder %s16, 1
    %p34 = por %p32, %p33
    %p35 = scmp.ne.s32.totalorder %s24, %s25
    %p36 = scmp.eq.s32.totalorder %s16, 0
    %p37 = por %p35, %p36
    %p38 = scmp.ne.s32.totalorder %s24, %s25
    %p39 = scmp.eq.s32.totalorder %s17, 1
    %p40 = por %p38, %p39
    %p42 = scmp.ne.s32.totalorder %s25, %s41
    %p43 = scmp.eq.s32.totalorder %s17, 0
    %p44 = por %p42, %p43
    %s46 = sadd.s32 %s45, 1
    %p49 = scmp.eq.s32.totalorder %s11, 1
    %p50 = scmp.ne.s32.totalorder %s45, %s47
    %p51 = scmp.eq.s32.totalorder %s11, 0
    %p52 = por %p50, %p51
    %p53 = scmp.ne.s32.totalorder %s45, %s47
    %p54 = scmp.eq.s32.totalorder %s16, 1
    %p55 = por %p53, %p54
    %p56 = scmp.ne.s32.totalorder %s47, %s48
    %p57 = scmp.eq.s32.totalorder %s16, 0
    %p58 = por %p56, %p57
    %p59 = scmp.ne.s32.totalorder %s47, %s48
    %p60 = scmp.eq.s32.totalorder %s17, 1
    %p61 = por %p59, %p60
    %p63 = scmp.ne.s32.totalorder %s48, %s62
    %p64 = scmp.eq.s32.totalorder %s17, 0
    %p65 = por %p63, %p64
    %s67 = sadd.s32 %s66, 1
    %p70 = scmp.eq.s32.totalorder %s11, 1
    %p71 = scmp.ne.s32.totalorder %s66, %s68
    %p72 = scmp.eq.s32.totalorder %s11, 0
    %p73 = por %p71, %p72
    %p74 = scmp.ne.s32.totalorder %s66, %s68
    %p75 = scmp.eq.s32.totalorder %s16, 1
    %p76 = por %p74, %p75
    %p77 = scmp.ne.s32.totalorder %s68, %s69
    %p78 = scmp.eq.s32.totalorder %s16, 0
    %p79 = por %p77, %p78
    %p80 = scmp.ne.s32.totalorder %s68, %s69
    %p81 = scmp.eq.s32.totalorder %s17, 1
    %p82 = por %p80, %p81
    %p84 = scmp.ne.s32.totalorder %s69, %s83
    %p85 = scmp.eq.s32.totalorder %s17, 0
    %p86 = por %p84, %p85
    %s88 = sadd.s32 %s87, 1
    %p91 = scmp.eq.s32.totalorder %s11, 1
    %p92 = scmp.ne.s32.totalorder %s87, %s89
    %p93 = scmp.eq.s32.totalorder %s11, 0
    %p94 = por %p92, %p93
    %p95 = scmp.ne.s32.totalorder %s87, %s89
    %p96 = scmp.eq.s32.totalorder %s16, 1
    %p97 = por %p95, %p96
    %p98 = scmp.ne.s32.totalorder %s89, %s90
    %p99 = scmp.eq.s32.totalorder %s16, 0
    %p100 = por %p98, %p99
    %p101 = scmp.ne.s32.totalorder %s89, %s90
    %p102 = scmp.eq.s32.totalorder %s17, 1
    %p103 = por %p101, %p102
    %p105 = scmp.ne.s32.totalorder %s90, %s104
    %p106 = scmp.eq.s32.totalorder %s17, 0
    %p107 = por %p105, %p106
    %s109 = sadd.s32 %s108, 1
    %p112 = scmp.eq.s32.totalorder %s11, 1
    %p113 = scmp.ne.s32.totalorder %s108, %s110
    %p114 = scmp.eq.s32.totalorder %s11, 0
    %p115 = por %p113, %p114
    %p116 = scmp.ne.s32.totalorder %s108, %s110
    %p117 = scmp.eq.s32.totalorder %s16, 1
    %p118 = por %p116, %p117
    %p119 = scmp.ne.s32.totalorder %s110, %s111
    %p120 = scmp.eq.s32.totalorder %s16, 0
    %p121 = por %p119, %p120
    %p122 = scmp.ne.s32.totalorder %s110, %s111
    %p123 = scmp.eq.s32.totalorder %s17, 1
    %p124 = por %p122, %p123
    %p126 = scmp.ne.s32.totalorder %s111, %s125
    %p127 = scmp.eq.s32.totalorder %s17, 0
    %p128 = por %p126, %p127
    %s129 = ssub.s32 %s11, %s18
    %p130 = scmp.eq.s32.totalorder %s129, 0
    %s132 = sadd.s32 %s131, 1
    %s133 = scalar_select %p130, %s131, %s132
    %p136 = pneg %p130
    %p137 = scmp.eq.s32.totalorder %s11, 1
    %p138 = por %p136, %p137
    %p139 = scmp.ne.s32.totalorder %s131, %s134
    %p140 = scmp.eq.s32.totalorder %s11, 0
    %p141 = por %p139, %p140
    %p142 = scmp.ne.s32.totalorder %s131, %s134
    %p143 = scmp.eq.s32.totalorder %s16, 1
    %p144 = por %p142, %p143
    %p145 = scmp.ne.s32.totalorder %s134, %s135
    %p146 = scmp.eq.s32.totalorder %s16, 0
    %p147 = por %p145, %p146
    %p148 = scmp.ne.s32.totalorder %s134, %s135
    %p149 = scmp.eq.s32.totalorder %s17, 1
    %p150 = por %p148, %p149
    %p152 = scmp.ne.s32.totalorder %s135, %s151
    %p153 = scmp.eq.s32.totalorder %s17, 0
    %p154 = por %p152, %p153
    %p155 = scmp.le.s32.totalorder 1, %s11
    %p156 = scmp.lt.s32.totalorder %s11, 3
    %p157 = pnand %p155, %p156
    %p158 = pneg %p157
    // Predicated region
    $region9: #{conv_dw_pallas.1} parent=5 // pred_check
      _
    $region10: #{conv_dw_pallas.1} parent=5 // pred_check_branch
      %160 = sbr.rel (%p157) target = $region12
    $region11: #{conv_dw_pallas.1} parent=5 // pred_region
      %s161 = ssub.s32 %s11, 1
      // Predicated region
      $region13: #{conv_dw_pallas.1} parent=11 // pred_check
        %p162 = pneg %p58
      $region14: #{conv_dw_pallas.1} parent=11 // pred_check_branch
        %164 = sbr.rel (%p162) target = $region16
      $region15: #{conv_dw_pallas.1} parent=11 // pred_region
        _
      $region16: #{conv_dw_pallas.1} parent=11 // pred_fallthru
        _
      // Predicated region
      $region17: #{conv_dw_pallas.1} parent=11 // pred_check
        %p165 = pneg %p79
      $region18: #{conv_dw_pallas.1} parent=11 // pred_check_branch
        %167 = sbr.rel (%p165) target = $region20
      $region19: #{conv_dw_pallas.1} parent=11 // pred_region
        _
      $region20: #{conv_dw_pallas.1} parent=11 // pred_fallthru
        _
      // Predicated region
      $region21: #{conv_dw_pallas.1} parent=11 // pred_check
        %p168 = pneg %p100
      $region22: #{conv_dw_pallas.1} parent=11 // pred_check_branch
        %170 = sbr.rel (%p168) target = $region24
      $region23: #{conv_dw_pallas.1} parent=11 // pred_region
        _
      $region24: #{conv_dw_pallas.1} parent=11 // pred_fallthru
        _
      // Predicated region
      $region25: #{conv_dw_pallas.1} parent=11 // pred_check
        %p171 = pneg %p121
      $region26: #{conv_dw_pallas.1} parent=11 // pred_check_branch
        %173 = sbr.rel (%p171) target = $region28
      $region27: #{conv_dw_pallas.1} parent=11 // pred_region
        _
      $region28: #{conv_dw_pallas.1} parent=11 // pred_fallthru
        _
    $region12: #{conv_dw_pallas.1} parent=5 // pred_fallthru
      _
    %p174 = scmp.lt.s32.totalorder %s11, 2
    // Predicated region
    $region29: #{conv_dw_pallas.1} parent=5 // pred_check
      %p175 = pneg %p174
    $region30: #{conv_dw_pallas.1} parent=5 // pred_check_branch
      %177 = sbr.rel (%p175) target = $region32
    $region31: #{conv_dw_pallas.1} parent=5 // pred_region
      // Predicated region
      $region33: #{conv_dw_pallas.1} parent=31 // pred_check
        %p178 = pneg %p31
      $region34: #{conv_dw_pallas.1} parent=31 // pred_check_branch
        %180 = sbr.rel (%p178) target = $region36
      $region35: #{conv_dw_pallas.1} parent=31 // pred_region
        %p181 = scmp.lt.s32.totalorder %s11, 1
        %s182 = scalar_select %p181, %s11, 1
        %s183 = smul.addr %s182, 2
        %s184 = smul.addr %s183, 8
        %s185 = scalar_lea.vmem %s0, %s184
      $region36: #{conv_dw_pallas.1} parent=31 // pred_fallthru
        _
    $region32: #{conv_dw_pallas.1} parent=5 // pred_fallthru
      _
    %p186 = scmp.le.s32.totalorder 1, %s11
    %p187 = scmp.lt.s32.totalorder %s11, 3
    %p188 = pnand %p186, %p187
    %p189 = pneg %p188
    // Predicated region
    $region37: #{conv_dw_pallas.1} parent=5 // pred_check
      _
    $region38: #{conv_dw_pallas.1} parent=5 // pred_check_branch
      %191 = sbr.rel (%p188) target = $region40
    $region39: #{conv_dw_pallas.1} parent=5 // pred_region
      %s192 = ssub.s32 %s11, 1
      %p193 = scmp.lt.s32.totalorder %s16, 1
      %s194 = scalar_select %p193, %s16, 1
      %s195 = smul.addr %s194, 2
      %s196 = smul.addr %s195, 8
      %s197 = scalar_lea.vmem %s0, %s196
      %p198 = pneg %p37
      %p199 = pneg %p34
      %p200 = pneg %p58
      %p201 = pneg %p55
      %p202 = pneg %p79
      %p203 = pneg %p76
      %p204 = pneg %p100
      %p205 = pneg %p97
      %p206 = pneg %p121
      %p207 = pneg %p118
      %p208 = pneg %p147
      %p209 = pneg %p144
      %p210 = scmp.lt.s32.totalorder %s16, 1
      %s211 = scalar_select %p210, %s16, 1
      %s212 = smul.addr %s211, 2
      %s213 = smul.addr %s212, 8
      %s214 = scalar_lea.vmem %s5, %s213
      %p215 = scmp.lt.s32.totalorder %s16, 1
      %s216 = scalar_select %p215, %s16, 1
      %s217 = smul.addr %s216, 2
      %s218 = smul.addr %s217, 8
      %s219 = scalar_lea.vmem %s0, %s218
      %p220 = scmp.lt.s32.totalorder %s16, 1
      %s221 = scalar_select %p220, %s16, 1
      %s222 = smul.addr %s221, 2
      %s223 = smul.addr %s222, 8
      %s224 = scalar_lea.vmem %s5, %s223
      %v226 = vld [vmem:[%s219] sm:$0xff]
      %v227 = vld [vmem:[%s219 + $0x8] sm:$0xff]
      %v228 = vld [vmem:[%s1] sm:$0xff]
      %v229 = vld [vmem:[%s1 + $0x8] sm:$0x1]
      %v230 = vlaneseq
      %v231 = vshrl.u32 %v230, 7
      %v232 = vadd.s32 %v231, 8
      %v233 = vrot.slane %v226, 7
      %v234 = vrot.slane %v227, 7
      %vm235 = vcmp.lt.s32.totalorder %v231, 1
      %v236 = vsel %vm235, %v233, %v234
      %v237 = vsel %vm235, %v234, %v233
      %vm238 = vcmp.ge.s32.totalorder %v231, 1
      %vm239 = vcmp.ge.s32.totalorder %v232, 1
      %v240 = vsel %vm238, %v237, 0.0
      %v241 = vsel %vm239, %v236, 0.0
      %vm242 = vcmask 1048064
      %243 = vrot.lane.b32.xlu0 %v240, 64
      %v244 = vpop.permute.xlu0 %243
      %v245 = vsel %vm242, %v244, %v240
      %246 = vrot.lane.b32.xlu0 %v241, 64
      %v247 = vpop.permute.xlu0 %246
      %v248 = vsel %vm242, %v247, %v241
      %249 = vrot.lane.b32.xlu0 %v245, 64
      %v250 = vpop.permute.xlu0 %249
      %251 = vrot.lane.b32.xlu0 %v248, 64
      %v252 = vpop.permute.xlu0 %251
      %v253 = vsel %vm242, %v250, %v240
      %v254 = vsel %vm242, %v252, %v241
      %v255 = vlaneseq
      %v256 = vshrl.u32 %v255, 7
      %v257 = vsub.s32 0, %v256
      %v258 = vrot.slane %v228, %v257
      %260 = vrot.lane.b32.xlu0 %v258, 60
      %v261 = vpop.permute.xlu0 %260
      %v263 = vmul.f32 %v253, %v261
      %v264 = vmul.f32 %v254, %v261
      %v265 = vadd.f32 %v263, 0.0
      %v266 = vadd.f32 %v264, 0.0
      %v267 = vlaneseq
      %v268 = vshrl.u32 %v267, 7
      %v269 = vsub.s32 1, %v268
      %v270 = vrot.slane %v228, %v269
      %v271 = vmul.f32 %v240, %v270
      %v272 = vmul.f32 %v241, %v270
      %275 = vrot.lane.b32.xlu0 %v271, 60
      %v276 = vpop.permute.xlu0 %275
      %277 = vrot.lane.b32.xlu0 %v272, 60
      %v278 = vpop.permute.xlu0 %277
      %v281 = vadd.f32 %v265, %v276
      %v282 = vadd.f32 %v266, %v278
      %v283 = vlaneseq
      %v284 = vshrl.u32 %v283, 7
      %v285 = vsub.s32 2, %v284
      %v286 = vrot.slane %v228, %v285
      %288 = vrot.lane.b32.xlu0 %v286, 4
      %v289 = vpop.permute.xlu0 %288
      %v291 = vmul.f32 %v253, %v289
      %v292 = vmul.f32 %v254, %v289
      %295 = vrot.lane.b32.xlu0 %v291, 56
      %v296 = vpop.permute.xlu0 %295
      %297 = vrot.lane.b32.xlu0 %v292, 56
      %v298 = vpop.permute.xlu0 %297
      %v301 = vadd.f32 %v281, %v296
      %v302 = vadd.f32 %v282, %v298
      %303 = vrot.lane.b32.xlu0 %v226, 64
      %v304 = vpop.permute.xlu0 %303
      %v305 = vsel %vm242, %v304, %v226
      %306 = vrot.lane.b32.xlu0 %v227, 64
      %v307 = vpop.permute.xlu0 %306
      %v308 = vsel %vm242, %v307, %v227
      %309 = vrot.lane.b32.xlu0 %v305, 64
      %v310 = vpop.permute.xlu0 %309
      %311 = vrot.lane.b32.xlu0 %v308, 64
      %v312 = vpop.permute.xlu0 %311
      %v313 = vsel %vm242, %v310, %v226
      %v314 = vsel %vm242, %v312, %v227
      %v315 = vlaneseq
      %v316 = vshrl.u32 %v315, 7
      %v317 = vsub.s32 3, %v316
      %v318 = vrot.slane %v228, %v317
      %320 = vrot.lane.b32.xlu0 %v318, 60
      %v321 = vpop.permute.xlu0 %320
      %v323 = vmul.f32 %v313, %v321
      %v324 = vmul.f32 %v314, %v321
      %v325 = vadd.f32 %v301, %v323
      %v326 = vadd.f32 %v302, %v324
      %v327 = vlaneseq
      %v328 = vshrl.u32 %v327, 7
      %v329 = vsub.s32 4, %v328
      %v330 = vrot.slane %v228, %v329
      %v331 = vmul.f32 %v226, %v330
      %v332 = vmul.f32 %v227, %v330
      %335 = vrot.lane.b32.xlu0 %v331, 60
      %v336 = vpop.permute.xlu0 %335
      %337 = vrot.lane.b32.xlu0 %v332, 60
      %v338 = vpop.permute.xlu0 %337
      %v341 = vadd.f32 %v325, %v336
      %v342 = vadd.f32 %v326, %v338
      %v343 = vlaneseq
      %v344 = vshrl.u32 %v343, 7
      %v345 = vsub.s32 5, %v344
      %v346 = vrot.slane %v228, %v345
      %348 = vrot.lane.b32.xlu0 %v346, 4
      %v349 = vpop.permute.xlu0 %348
      %v351 = vmul.f32 %v313, %v349
      %v352 = vmul.f32 %v314, %v349
      %355 = vrot.lane.b32.xlu0 %v351, 56
      %v356 = vpop.permute.xlu0 %355
      %357 = vrot.lane.b32.xlu0 %v352, 56
      %v358 = vpop.permute.xlu0 %357
      %v361 = vadd.f32 %v341, %v356
      %v362 = vadd.f32 %v342, %v358
      %v363 = vrot.slane %v226, 1
      %v364 = vrot.slane %v227, 1
      %vm365 = vcmp.lt.s32.totalorder %v231, 7
      %v366 = vsel %vm365, %v363, %v364
      %v367 = vsel %vm365, %v364, %v363
      %vm368 = vcmp.lt.s32.totalorder %v231, 15
      %vm369 = vcmp.lt.s32.totalorder %v232, 15
      %v370 = vsel %vm368, %v366, 0.0
      %v371 = vsel %vm369, %v367, 0.0
      %372 = vrot.lane.b32.xlu0 %v370, 64
      %v373 = vpop.permute.xlu0 %372
      %v374 = vsel %vm242, %v373, %v370
      %375 = vrot.lane.b32.xlu0 %v371, 64
      %v376 = vpop.permute.xlu0 %375
      %v377 = vsel %vm242, %v376, %v371
      %378 = vrot.lane.b32.xlu0 %v374, 64
      %v379 = vpop.permute.xlu0 %378
      %380 = vrot.lane.b32.xlu0 %v377, 64
      %v381 = vpop.permute.xlu0 %380
      %v382 = vsel %vm242, %v379, %v370
      %v383 = vsel %vm242, %v381, %v371
      %v384 = vlaneseq
      %v385 = vshrl.u32 %v384, 7
      %v386 = vsub.s32 6, %v385
      %v387 = vrot.slane %v228, %v386
      %389 = vrot.lane.b32.xlu0 %v387, 60
      %v390 = vpop.permute.xlu0 %389
      %v392 = vmul.f32 %v382, %v390
      %v393 = vmul.f32 %v383, %v390
      %v394 = vadd.f32 %v361, %v392
      %v395 = vadd.f32 %v362, %v393
      %v396 = vlaneseq
      %v397 = vshrl.u32 %v396, 7
      %v398 = vsub.s32 7, %v397
      %v399 = vrot.slane %v228, %v398
      %v400 = vmul.f32 %v370, %v399
      %v401 = vmul.f32 %v371, %v399
      %404 = vrot.lane.b32.xlu0 %v400, 60
      %v405 = vpop.permute.xlu0 %404
      %406 = vrot.lane.b32.xlu0 %v401, 60
      %v407 = vpop.permute.xlu0 %406
      %v410 = vadd.f32 %v394, %v405
      %v411 = vadd.f32 %v395, %v407
      %v412 = vlaneseq
      %v413 = vshrl.u32 %v412, 7
      %v414 = vsub.s32 0, %v413
      %v415 = vrot.slane %v229, %v414
      %417 = vrot.lane.b32.xlu0 %v415, 4
      %v418 = vpop.permute.xlu0 %417
      %v420 = vmul.f32 %v382, %v418
      %v421 = vmul.f32 %v383, %v418
      %424 = vrot.lane.b32.xlu0 %v420, 56
      %v425 = vpop.permute.xlu0 %424
      %426 = vrot.lane.b32.xlu0 %v421, 56
      %v427 = vpop.permute.xlu0 %426
      %v430 = vadd.f32 %v410, %v425
      %v431 = vadd.f32 %v411, %v427
      %v432 = vld [vmem:[%s2] sm:$0x1]
      %v434 = vlaneseq
      %v435 = vshrl.u32 %v434, 7
      %v436 = vsub.s32 0, %v435
      %v437 = vrot.slane %v432, %v436
      %438 = vrot.lane.b32.xlu0 %v437, 60
      %v439 = vpop.permute.xlu0 %438
      %v441 = vadd.f32 %v430, %v439
      %v442 = vadd.f32 %v431, %v439
      %v443 = vmax.f32 %v441, 0.0
      %v444 = vmax.f32 %v442, 0.0
      %v445 = vpack.c.bf16 %v444, %v443
      %v446 = vld [vmem:[%s3] sm:$0xf]
      %v447 = vld [vmem:[%s3 + $0x4] sm:$0xf]
      %v448 = vld [vmem:[%s3 + $0x8] sm:$0xf]
      %v449 = vld [vmem:[%s3 + $0xc] sm:$0xf]
      %v450 = vld [vmem:[%s3 + $0x10] sm:$0xf]
      %v451 = vld [vmem:[%s3 + $0x14] sm:$0xf]
      %v452 = vld [vmem:[%s3 + $0x18] sm:$0xf]
      %v453 = vld [vmem:[%s3 + $0x1c] sm:$0xf]
      %v454 = vld [vmem:[%s4] sm:$0x1]
      %v456 = vlaneseq
      %v457 = vshrl.u32 %v456, 7
      %v458 = vsub.s32 0, %v457
      %v459 = vrot.slane %v454, %v458
      %462 = vrot.lane.b32.xlu0 %v445, 68
      %v463 = vpop.permute.xlu0 %462
      %v472 = vunpack.c.l.b16 %v446
      %v473 = vunpack.c.l.b16 %v447
      %v474 = vunpack.c.l.b16 %v448
      %v475 = vunpack.c.l.b16 %v449
      %v476 = vunpack.c.l.b16 %v450
      %v477 = vunpack.c.l.b16 %v451
      %v478 = vunpack.c.l.b16 %v452
      %v479 = vunpack.c.l.b16 %v453
      %v480 = vpack.c.b16 %v473, %v472
      %v481 = vpack.c.b16 %v475, %v474
      %v482 = vpack.c.b16 %v477, %v476
      %v483 = vpack.c.b16 %v479, %v478
      %vm488 = vcmask 523264
      %v490 = vsel %vm488, %v463, 0
      %492 = vmatprep.subr.bf16.mxu0 0
      %493 = vmatpush1.bf16.msra.mxu0 0
      %494 = vmatprep.subr.bf16.mxu0 0
      %495 = vmatpush1.bf16.msra.mxu0 0
      %496 = vmatprep.subr.bf16.mxu0 0
      %497 = vmatpush1.bf16.msra.mxu0 0
      %498 = vmatprep.subr.bf16.mxu0 0
      %499 = vmatpush1.bf16.msra.mxu0 0
      %500 = vmatprep.subr.bf16.mxu0 0
      %501 = vmatpush1.bf16.msra.mxu0 %v483
      %502 = vmatprep.subr.bf16.mxu0 0
      %503 = vmatpush1.bf16.msra.mxu0 %v482
      %504 = vmatprep.subr.bf16.mxu0 0
      %505 = vmatpush1.bf16.msra.mxu0 %v481
      %506 = vmatprep.subr.bf16.mxu0 0
      %507 = vmatpush1.bf16.msra.mxu0 %v480
      %508 = vmatprep.subr.bf16.mxu0 0
      %509 = vmatpush2.bf16.msra.mxu0 0
      %510 = vmatprep.subr.bf16.mxu0 0
      %511 = vmatpush2.bf16.msra.mxu0 0
      %512 = vmatprep.subr.bf16.mxu0 0
      %513 = vmatpush2.bf16.msra.mxu0 0
      %514 = vmatprep.subr.bf16.mxu0 0
      %515 = vmatpush2.bf16.msra.mxu0 0
      %516 = vmatprep.subr.bf16.mxu0 0
      %517 = vmatpush2.bf16.msra.mxu0 0
      %518 = vmatprep.subr.bf16.mxu0 0
      %519 = vmatpush2.bf16.msra.mxu0 0
      %520 = vmatprep.subr.bf16.mxu0 0
      %521 = vmatpush2.bf16.msra.mxu0 0
      %522 = vmatprep.subr.bf16.mxu0 0
      %523 = vmatpush2.bf16.msra.mxu0 0
      %524 = vmatprep.mubr.bf16.mxu0 0
      %525 = vmatmul.mubr.bf16.gmra.mxu0 %v490
      %v526 = vpop.f32.mrf.mxu0
      %v527 = vadd.f32 %v459, %v526
      %v528 = vpop.f32.mrf.mxu0
      %v529 = vpop.f32.mrf.mxu0
      %v530 = vadd.f32 %v459, %v529
      %v531 = vpop.f32.mrf.mxu0
      %532 = vdwg.mxu0
      %v533 = vmax.f32 %v527, 0.0
      %v534 = vmax.f32 %v530, 0.0
      %535 = vst [vmem:[%s224] sm:$0xff] %v533
      %536 = vst [vmem:[%s224 + $0x8] sm:$0xff] %v534
      %p537 = scmp.lt.s32.totalorder %s16, 1
      %s538 = scalar_select %p537, %s16, 1
      %s539 = smul.addr %s538, 2
      %s540 = smul.addr %s539, 8
      %s541 = scalar_lea.vmem %s5, %s540
      // Predicated region
      $region41: #{conv_dw_pallas.1} parent=39 // pred_check
        %p542 = pneg %p144
      $region42: #{conv_dw_pallas.1} parent=39 // pred_check_branch
        %544 = sbr.rel (%p542) target = $region44
      $region43: #{conv_dw_pallas.1} parent=39 // pred_region
        _
      $region44: #{conv_dw_pallas.1} parent=39 // pred_fallthru
        _
    $region40: #{conv_dw_pallas.1} parent=5 // pred_fallthru
      _
    %p545 = scmp.le.s32.totalorder 2, %s11
    // Predicated region
    $region45: #{conv_dw_pallas.1} parent=5 // pred_check
      %p546 = pneg %p545
    $region46: #{conv_dw_pallas.1} parent=5 // pred_check_branch
      %548 = sbr.rel (%p546) target = $region48
    $region47: #{conv_dw_pallas.1} parent=5 // pred_region
      %s549 = ssub.s32 %s11, 2
      // Predicated region
      $region49: #{conv_dw_pallas.1} parent=47 // pred_check
        %p550 = pneg %p150
      $region50: #{conv_dw_pallas.1} parent=47 // pred_check_branch
        %552 = sbr.rel (%p550) target = $region52
      $region51: #{conv_dw_pallas.1} parent=47 // pred_region
        %p553 = scmp.lt.s32.totalorder %s17, 1
        %s554 = scalar_select %p553, %s17, 1
        %s555 = smul.addr %s554, 2
        %s556 = smul.addr %s555, 8
        %s557 = scalar_lea.vmem %s5, %s556
      $region52: #{conv_dw_pallas.1} parent=47 // pred_fallthru
        _
    $region48: #{conv_dw_pallas.1} parent=5 // pred_fallthru
      _
  $region6: #{conv_dw_pallas.1} parent=0 // loop_footer
    %s15 = sadd.s32 1, %s11
  $region7: #{conv_dw_pallas.1} parent=0 // loop_footer_branch
    %10 = sbr.rel target = $region3
  $region8: #{conv_dw_pallas.1} parent=0 // loop_exit
    _

</llo_original>
